<compile_context>
chip_gen: v7x
topology: tpu7x:2x2x1
jax: 0.10.0
libtpu: 0.0.40
codegen_flags: <defaults>
</compile_context>

<pallas_src>
import jax
import jax.numpy as jnp
from jax.experimental import pallas as pl
from jax.experimental.pallas import tpu as pltpu

ALPHA = 0.25
GAMMA = 2.0
EPS = 1e-7


def _make_focal_kernel(alpha, gamma, eps):
    def kernel(p_ref, y_ref, o_ref):
        """One (rows, cols) tile of the focal-loss partial sum.

        p_ref : (rows, cols) softmax probabilities (native dtype)
        y_ref : (rows, cols) one-hot mask (native dtype)
        o_ref : (1, 1, cols) f32 per-partition partial sum (VMEM-resident
                accumulator: same output block across the inner grid axis).
        """
        @pl.when(pl.program_id(1) == 0)
        def _():
            o_ref[...] = jnp.zeros_like(o_ref)

        p = p_ref[...].astype(jnp.float32)   # in-kernel upcast (no wrapper pass)
        y = y_ref[...].astype(jnp.float32)

        q = 1.0 - p
        if gamma == 2.0:
            focus = q * q                    # explicit square: VPU only
        elif gamma == 1.0:
            focus = q
        else:
            focus = jnp.power(q, gamma)      # generic fallback (EUP exp/log)

        ce = -jnp.log(p + eps) * y           # log is the only required EUP op
        fl = (alpha * focus) * ce            # (rows, cols) f32

        # Collapse the row (sublane) axis -> tiny lane-dense partial.
        o_ref[...] += jnp.sum(fl, axis=0, keepdims=True)[None, :, :]

    return kernel


def _pick_col_block(k, rows, target_elems):
    """Largest multiple of 128 that divides k with rows*cols <= target."""
    if k % 128 != 0:
        # Rare for image H*W; fall back to the full dimension (still legal as a
        # block shape since it equals the array dim).
        return k
    cap = min(k, max(128, (target_elems // max(rows, 1)) // 128 * 128))
    for cols in range(cap, 127, -128):
        if k % cols == 0:
            return cols
    return 128  # k % 128 == 0 so 128 always divides


def _num_tensorcores():
    try:
        return max(1, int(getattr(jax.devices()[0], "num_cores", 1)))
    except Exception:
        return 1


def focal_loss_pallas(pred, mask, *, alpha=ALPHA, gamma=GAMMA, eps=EPS,
                      tile_elems=262144):
    """pred, mask: (N, C, H, W). Returns scalar f32 focal loss."""
    n, c, h, w = pred.shape
    assert mask.shape == pred.shape
    denom = n * h * w                 # sum over C, mean over (N, H*W)

    rows = n * c
    k = h * w

    # Natural 2-D view; contiguous reshape is free (no extra HBM pass).
    p2 = pred.reshape(rows, k)
    y2 = mask.reshape(rows, k)

    col_block = _pick_col_block(k, rows, tile_elems)
    nblocks = k // col_block

    tc = _num_tensorcores()
    partitions = tc if (tc > 1 and nblocks % tc == 0) else 1
    blocks_per_part = nblocks // partitions

    def in_map(pc, i):
        return (0, pc * blocks_per_part + i)

    partials = pl.pallas_call(
        _make_focal_kernel(alpha, gamma, eps),
        out_shape=jax.ShapeDtypeStruct((partitions, 1, col_block), jnp.float32),
        grid_spec=pltpu.PrefetchScalarGridSpec(
            num_scalar_prefetch=0,
            grid=(partitions, blocks_per_part),
            in_specs=[
                pl.BlockSpec((rows, col_block), in_map),
                pl.BlockSpec((rows, col_block), in_map),
            ],
            out_specs=pl.BlockSpec((1, 1, col_block),
                                   lambda pc, i: (pc, 0, 0)),
        ),
        compiler_params=pltpu.CompilerParams(
            dimension_semantics=("parallel", "arbitrary"),
        ),
    )(p2, y2)

    return jnp.sum(partials) / jnp.float32(denom)


def focal_loss_ref(pred, mask, *, alpha=ALPHA, gamma=GAMMA, eps=EPS):
    """Pure-JAX reference matching the PyTorch module."""
    n, c = pred.shape[0], pred.shape[1]
    p = pred.reshape(n, c, -1).astype(jnp.float32)
    y = mask.reshape(n, c, -1).astype(jnp.float32)
    ce = -jnp.log(p + eps) * y
    fl = jnp.power(1.0 - p, gamma) * ce * alpha
    fl = jnp.sum(fl, axis=1)
    return jnp.mean(fl)


if __name__ == "__main__":
    key = jax.random.PRNGKey(0)
    k1, k2 = jax.random.split(key)

    N, C, H, W = 2, 4, 16, 16

    # pred: softmax over the channel dim (as documented in the module)
    logits = jax.random.normal(k1, (N, C, H, W), dtype=jnp.float32)
    pred = jax.nn.softmax(logits, axis=1)

    # mask: one-hot over the channel dim
    labels = jax.random.randint(k2, (N, H, W), 0, C)
    mask = jax.nn.one_hot(labels, C, axis=1, dtype=jnp.float32)  # (N, C, H, W)

    loss = jax.block_until_ready(focal_loss_pallas(pred, mask))
    ref = jax.block_until_ready(focal_loss_ref(pred, mask))

    assert jnp.allclose(loss, ref, rtol=1e-5, atol=1e-6), (loss, ref)
    print("KERNEL_OK")
</pallas_src>

<mosaic_0001>
module attributes {stable_mosaic.version = 11 : i64} {
  func.func @kernel(%arg0: i32, %arg1: i32, %arg2: memref<8x256xf32, #tpu.memory_space<vmem>>, %arg3: memref<8x256xf32, #tpu.memory_space<vmem>>, %arg4: memref<1x1x256xf32, #tpu.memory_space<vmem>>) attributes {dimension_semantics = [#tpu.dimension_semantics<parallel>, #tpu.dimension_semantics<arbitrary>], iteration_bounds = array<i64: 1, 1>, scalar_prefetch = 0 : i64, scratch_operands = 0 : i64, tpu.core_type = #tpu.core_type<tc>, window_params = [{transform_indices = @transform_0, window_bounds = array<i64: 8, 256>}, {transform_indices = @transform_1, window_bounds = array<i64: 8, 256>}, {transform_indices = @transform_2, window_bounds = array<i64: 1, 1, 256>}]} {
    %c0_i32 = arith.constant 0 : i32
    %0 = arith.cmpi eq, %arg1, %c0_i32 : i32
    %1 = arith.extui %0 : i1 to i32
    %c0_i32_0 = arith.constant 0 : i32
    %2 = arith.cmpi ne, %1, %c0_i32_0 : i32
    scf.if %2 {
      %cst_14 = arith.constant 0.000000e+00 : f32
      %23 = vector.broadcast %cst_14 : f32 to vector<1x1x256xf32>
      %c0_15 = arith.constant 0 : index
      %c0_16 = arith.constant 0 : index
      %c0_17 = arith.constant 0 : index
      %24 = vector.load %arg4[%c0_15, %c0_16, %c0_17] : memref<1x1x256xf32, #tpu.memory_space<vmem>>, vector<1x1x256xf32>
      tpu.vector_store %arg4[%c0_15, %c0_16, %c0_17], %23 {strides = array<i32>} : memref<1x1x256xf32, #tpu.memory_space<vmem>>, vector<1x1x256xf32>,
    } else {
    }
    %c0 = arith.constant 0 : index
    %c0_1 = arith.constant 0 : index
    %3 = vector.load %arg2[%c0, %c0_1] : memref<8x256xf32, #tpu.memory_space<vmem>>, vector<8x256xf32>
    %c0_2 = arith.constant 0 : index
    %c0_3 = arith.constant 0 : index
    %4 = vector.load %arg3[%c0_2, %c0_3] : memref<8x256xf32, #tpu.memory_space<vmem>>, vector<8x256xf32>
    %cst = arith.constant 1.000000e+00 : f32
    %5 = vector.broadcast %cst : f32 to vector<8x256xf32>
    %6 = arith.subf %5, %3 : vector<8x256xf32>
    %7 = arith.mulf %6, %6 : vector<8x256xf32>
    %cst_4 = arith.constant 1.000000e-07 : f32
    %8 = vector.broadcast %cst_4 : f32 to vector<8x256xf32>
    %9 = arith.addf %3, %8 : vector<8x256xf32>
    %10 = math.log %9 : vector<8x256xf32>
    %cst_5 = arith.constant 0.000000e+00 : f32
    %11 = vector.broadcast %cst_5 : f32 to vector<8x256xf32>
    %12 = arith.subf %11, %10 : vector<8x256xf32>
    %13 = arith.mulf %12, %4 : vector<8x256xf32>
    %cst_6 = arith.constant 2.500000e-01 : f32
    %14 = vector.broadcast %cst_6 : f32 to vector<8x256xf32>
    %15 = arith.mulf %14, %7 : vector<8x256xf32>
    %16 = arith.mulf %15, %13 : vector<8x256xf32>
    %c0_7 = arith.constant 0 : index
    %c0_8 = arith.constant 0 : index
    %c0_9 = arith.constant 0 : index
    %17 = vector.load %arg4[%c0_7, %c0_8, %c0_9] : memref<1x1x256xf32, #tpu.memory_space<vmem>>, vector<1x1x256xf32>
    %cst_10 = arith.constant dense<0.000000e+00> : vector<256xf32>
    %18 = vector.multi_reduction <add>, %16, %cst_10 [0] : vector<8x256xf32> to vector<256xf32>
    %19 = vector.shape_cast %18 : vector<256xf32> to vector<1x256xf32>
    %20 = vector.shape_cast %19 : vector<1x256xf32> to vector<1x1x256xf32>
    %21 = arith.addf %17, %20 : vector<1x1x256xf32>
    %c0_11 = arith.constant 0 : index
    %c0_12 = arith.constant 0 : index
    %c0_13 = arith.constant 0 : index
    %22 = vector.load %arg4[%c0_11, %c0_12, %c0_13] : memref<1x1x256xf32, #tpu.memory_space<vmem>>, vector<1x1x256xf32>
    tpu.vector_store %arg4[%c0_11, %c0_12, %c0_13], %21 {strides = array<i32>} : memref<1x1x256xf32, #tpu.memory_space<vmem>>, vector<1x1x256xf32>,
    return
  }
  func.func @transform_0(%arg0: i32, %arg1: i32) -> (i32, i32) {
    %c1_i32 = arith.constant 1 : i32
    %0 = arith.muli %arg0, %c1_i32 : i32
    %1 = arith.addi %0, %arg1 : i32
    %c0_i32 = arith.constant 0 : i32
    %c0_i32_0 = arith.constant 0 : i32
    return %c0_i32, %1 : i32, i32
  }
  func.func @transform_1(%arg0: i32, %arg1: i32) -> (i32, i32) {
    %c1_i32 = arith.constant 1 : i32
    %0 = arith.muli %arg0, %c1_i32 : i32
    %1 = arith.addi %0, %arg1 : i32
    %c0_i32 = arith.constant 0 : i32
    %c0_i32_0 = arith.constant 0 : i32
    return %c0_i32, %1 : i32, i32
  }
  func.func @transform_2(%arg0: i32, %arg1: i32) -> (i32, i32, i32) {
    %c0_i32 = arith.constant 0 : i32
    %c0_i32_0 = arith.constant 0 : i32
    %c0_i32_1 = arith.constant 0 : i32
    return %arg0, %c0_i32, %c0_i32_0 : i32, i32, i32
  }
}

</mosaic_0001>

<llo_original>
// kernel: tpu_custom_call.1
$region0: #{tpu_custom_call.1}
  #allocation0 [shape = 'u32[]', space=smem, size = 0x4, offset = 0x4, fixed_abs, tag = 'smem constant byte address 0x4 - core index']
  #allocation1 [shape = 'u32[144,128]{1,0:T(1,128)}', space=vmem, size = 0x12000, scoped, tag = 'internal scratch']
  %s0 = inlined_call_operand.hbm [shape: f32[8,256], index: 0, kind: input, shape index: {}]
  %s1 = inlined_call_operand.hbm [shape: f32[8,256], index: 1, kind: input, shape index: {}]
  %s2 = inlined_call_operand.hbm [shape: f32[1,1,256], index: 2, kind: output, shape index: {}]
  %s3 = sld [smem:[#allocation0]]
  $region30: #{tpu_custom_call.1} parent=0
    _
  %s5 = ssub.s32 1, %s3
  %s6 = scalar_select 0, %s5, %s3
  $region1: #{tpu_custom_call.1} parent=0
    #allocation2 [shape = 'u8[8192]{0}', space=vmem, size = 0x2000, scoped, tag = 'input window, operand 0, single buffered']
    #allocation3 [shape = 's32[1]{0}', space=sflag, size = 0x4, scoped, tag = 'scoped memory for tpu_custom_call.1']
    #allocation4 [shape = 's32[1]{0}', space=sflag, size = 0x4, scoped, tag = 'scoped memory for tpu_custom_call.1']
    #allocation5 [shape = 'u8[8192]{0}', space=vmem, size = 0x2000, scoped, tag = 'input window, operand 1, single buffered']
    #allocation6 [shape = 's32[1]{0}', space=sflag, size = 0x4, scoped, tag = 'scoped memory for tpu_custom_call.1']
    #allocation7 [shape = 'u8[1024]{0}', space=vmem, size = 0x400, scoped, tag = 'output window, operand 0, single buffered']
    %7 = vsyncpa [#allocation3], 0
    %8 = vsyncpa [#allocation6], 0
    %9 = vsyncpa [#allocation4], 0
    // Predicated region
    $region2: #{tpu_custom_call.1} parent=1 // pred_check
      _
    $region3: #{tpu_custom_call.1} parent=1 // pred_check_branch
      %11 = sbr.rel (0) target = $region5
    $region4: #{tpu_custom_call.1} parent=1 // pred_region
      %s12 = sadd.s32 0, 0
      %s13 = smul.u32 2, %s12
      %s15 = ssub.s32 256, 256
      %16 = vsyncadd [#allocation3], %s15
      %s17 = smul.addr %s13, 128
      %s18 = scalar_lea.hbm %s0, %s17
      %s20 = sshll.u32 [#allocation2], 4
      %s21 = int_to_ptr.vmem [resolvable:$true] %s20
      %23 = dma.hbm_to_vmem [thread:$0]  %s18, 256, %s21, [#allocation3]
    $region5: #{tpu_custom_call.1} parent=1 // pred_fallthru
      _
    // Predicated region
    $region6: #{tpu_custom_call.1} parent=1 // pred_check
      _
    $region7: #{tpu_custom_call.1} parent=1 // pred_check_branch
      %25 = sbr.rel (0) target = $region9
    $region8: #{tpu_custom_call.1} parent=1 // pred_region
      %s26 = sadd.s32 0, 0
      %s27 = smul.u32 2, %s26
      %s29 = ssub.s32 256, 256
      %30 = vsyncadd [#allocation6], %s29
      %s31 = smul.addr %s27, 128
      %s32 = scalar_lea.hbm %s1, %s31
      %s34 = sshll.u32 [#allocation5], 4
      %s35 = int_to_ptr.vmem [resolvable:$true] %s34
      %37 = dma.hbm_to_vmem [thread:$0]  %s32, 256, %s35, [#allocation6]
    $region9: #{tpu_custom_call.1} parent=1 // pred_fallthru
      _
    // Predicated region
    $region10: #{tpu_custom_call.1} parent=1 // pred_check
      _
    $region11: #{tpu_custom_call.1} parent=1 // pred_check_branch
      %39 = sbr.rel (0) target = $region13
    $region12: #{tpu_custom_call.1} parent=1 // pred_region
      %40 = dma.done [#allocation3], 256
    $region13: #{tpu_custom_call.1} parent=1 // pred_fallthru
      _
    // Predicated region
    $region14: #{tpu_custom_call.1} parent=1 // pred_check
      _
    $region15: #{tpu_custom_call.1} parent=1 // pred_check_branch
      %42 = sbr.rel (0) target = $region17
    $region16: #{tpu_custom_call.1} parent=1 // pred_region
      %43 = dma.done [#allocation6], 256
    $region17: #{tpu_custom_call.1} parent=1 // pred_fallthru
      _
    %s44 = sadd.s32 0, 0
    %s45 = smul.u32 2, %s44
    %s46 = sadd.s32 0, 0
    %s47 = smul.u32 2, %s46
    %p48 = scmp.eq.s32.totalorder 0, 0
    // Predicated region
    $region18: #{tpu_custom_call.1} parent=1 // pred_check
      %p49 = pneg %p48
    $region19: #{tpu_custom_call.1} parent=1 // pred_check_branch
      %51 = sbr.rel (%p49) target = $region21
    $region20: #{tpu_custom_call.1} parent=1 // pred_region
      %v52 = vlaneseq
      %vm53 = vcmp.ge.s32.totalorder %v52, 0
      %vm54 = vcmp.lt.s32.totalorder %v52, 256
      %vm55 = vmand %vm53, %vm54
      %56 = vst.msk [vmem:[#allocation7] sm:$0x3] %vm55, 0.0
    $region21: #{tpu_custom_call.1} parent=1 // pred_fallthru
      _
    %v57 = vld [vmem:[#allocation2] sm:$0xff]
    %v58 = vld [vmem:[#allocation2 + $0x8] sm:$0xff]
    %v59 = vld [vmem:[#allocation5] sm:$0xff]
    %v60 = vld [vmem:[#allocation5 + $0x8] sm:$0xff]
    %v61 = vsub.f32 1.0, %v57
    %v62 = vsub.f32 1.0, %v58
    %v63 = vmul.f32 %v61, %v61
    %v64 = vmul.f32 %v62, %v62
    %v65 = vadd.f32 %v57, 1e-07
    %v66 = vadd.f32 %v58, 1e-07
    %v67 = vlog2.pop %v65
    %v68 = vmul.f32 %v67, 0.6931472
    %v69 = vlog2.pop %v66
    %v70 = vmul.f32 %v69, 0.6931472
    %v71 = vsub.f32 0.0, %v68
    %v72 = vsub.f32 0.0, %v70
    %v73 = vmul.f32 %v71, %v59
    %v74 = vmul.f32 %v72, %v60
    %v75 = vmul.f32 %v63, 0.25
    %v76 = vmul.f32 %v64, 0.25
    %v77 = vmul.f32 %v75, %v73
    %v78 = vmul.f32 %v76, %v74
    %v79 = vld [vmem:[#allocation7] sm:$0x3]
    %v80 = vrot.slane %v77, 4
    %v81 = vadd.f32 %v77, %v80
    %v82 = vrot.slane %v81, 2
    %v83 = vadd.f32 %v81, %v82
    %v84 = vrot.slane %v83, 1
    %v85 = vadd.f32 %v83, %v84
    %v86 = vrot.slane %v78, 4
    %v87 = vadd.f32 %v78, %v86
    %v88 = vrot.slane %v87, 2
    %v89 = vadd.f32 %v87, %v88
    %v90 = vrot.slane %v89, 1
    %v91 = vadd.f32 %v89, %v90
    %v94 = vcombine.low %v85, %v91
    %v96 = vunpack.c.l.s4 1966171168
    %v97 = vunpack.c.0.s8 %v96
    %v98 = vlaneseq
    %v99 = vshrl.u32 %v98, 7
    %v100 = vsub.s32 %v97, %v99
    %v101 = vrot.slane %v94, %v100
    %v103 = vunpack.c.l.s4 1966171168
    %v104 = vunpack.c.0.s8 %v103
    %v105 = vlaneseq
    %v106 = vshrl.u32 %v105, 7
    %v107 = vsub.s32 %v104, %v106
    %v108 = vrot.slane %v101, %v107
    %v110 = vadd.f32 %v79, %v108
    %v111 = vlaneseq
    %vm112 = vcmp.ge.s32.totalorder %v111, 0
    %vm113 = vcmp.lt.s32.totalorder %v111, 256
    %vm114 = vmand %vm112, %vm113
    %115 = vst.msk [vmem:[#allocation7] sm:$0x3] %vm114, %v110
    // Predicated region
    $region22: #{tpu_custom_call.1} parent=1 // pred_check
      _
    $region23: #{tpu_custom_call.1} parent=1 // pred_check_branch
      %117 = sbr.rel (0) target = $region25
    $region24: #{tpu_custom_call.1} parent=1 // pred_region
      %s119 = ssub.s32 32, 32
      %120 = vsyncadd [#allocation4], %s119
      %s122 = sshll.u32 [#allocation7], 4
      %s123 = int_to_ptr.vmem [resolvable:$true] %s122
      %125 = dma.vmem_to_hbm [thread:$0]  %s123, 32, %s2, [#allocation4]
    $region25: #{tpu_custom_call.1} parent=1 // pred_fallthru
      _
    // Predicated region
    $region26: #{tpu_custom_call.1} parent=1 // pred_check
      _
    $region27: #{tpu_custom_call.1} parent=1 // pred_check_branch
      %127 = sbr.rel (0) target = $region29
    $region28: #{tpu_custom_call.1} parent=1 // pred_region
      %128 = dma.done [#allocation4], 32
    $region29: #{tpu_custom_call.1} parent=1 // pred_fallthru
      _
    %129 = vsyncpa [#allocation3], 1
    %130 = vsyncpa [#allocation6], 1
    %131 = vsyncpa [#allocation4], 1

</llo_original>
